<compile_context>
chip_gen: v6e
topology: v6e:2x2x1
jax: 0.10.0
libtpu: 0.0.40
codegen_flags: <defaults>
</compile_context>

<pallas_src>
import math

import jax
import jax.numpy as jnp
from jax.experimental import pallas as pl
from jax.experimental.pallas import tpu as pltpu

_LANE = 128


def _round_up(x: int, m: int) -> int:
    return ((x + m - 1) // m) * m


def _sublane(dtype) -> int:
    # Sublane granule: 8 for 4-byte, 16 for 2-byte, 32 for 1-byte dtypes.
    return max(8, 32 // jnp.dtype(dtype).itemsize)


# ----------------------------------------------------------------------------
# Path 1: in_features == out_features == 1  ->  pure VPU mul-add (no MXU).
# ----------------------------------------------------------------------------
def _scalar_linear_kernel(x_ref, w_ref, b_ref, o_ref):
    # x_ref/o_ref: (rows_block, 128) VMEM tile (lane- and sublane-dense).
    # w_ref/b_ref: (1, 1) scalars in SMEM.
    o_ref[...] = x_ref[...] * w_ref[0, 0] + b_ref[0, 0]


def _lr_forward_scalar(x, weight, bias, *, max_rows_per_block=512):
    batch = x.shape[0]
    dt = x.dtype
    sub = _sublane(dt)

    rows_total = -(-batch // _LANE)                         # ceil(batch / 128)
    rows_block = min(_round_up(rows_total, sub), max_rows_per_block)
    rows_pad = _round_up(rows_total, rows_block)
    padded = rows_pad * _LANE

    x_flat = x.reshape(-1)
    if padded != batch:
        x_flat = jnp.pad(x_flat, (0, padded - batch))
    x2 = x_flat.reshape(rows_pad, _LANE)

    w = weight.reshape(1, 1)
    b = bias.reshape(1, 1)

    out2 = pl.pallas_call(
        _scalar_linear_kernel,
        out_shape=jax.ShapeDtypeStruct((rows_pad, _LANE), dt),
        grid_spec=pltpu.PrefetchScalarGridSpec(
            num_scalar_prefetch=0,
            grid=(rows_pad // rows_block,),
            in_specs=[
                pl.BlockSpec((rows_block, _LANE), lambda i: (i, 0)),
                pl.BlockSpec(memory_space=pltpu.MemorySpace.SMEM),
                pl.BlockSpec(memory_space=pltpu.MemorySpace.SMEM),
            ],
            out_specs=pl.BlockSpec((rows_block, _LANE), lambda i: (i, 0)),
        ),
        compiler_params=pltpu.CompilerParams(
            dimension_semantics=("parallel",),
        ),
    )(x2, w, b)
    return out2.reshape(-1)[:batch].reshape(batch, 1)


# ----------------------------------------------------------------------------
# Path 2: general tiled matmul + bias on the MXU.
#   x: (M, K)   w_t: (K, N) (weight transposed once in the wrapper)
# ----------------------------------------------------------------------------
def _matmul_bias_kernel_f32out(x_ref, w_ref, b_ref, o_ref):
    # f32 output: accumulate directly into the k-resident output block; bias
    # is the k==0 initializer, so it is added exactly once.
    k = pl.program_id(2)

    @pl.when(k == 0)
    def _():
        o_ref[...] = jnp.broadcast_to(b_ref[...], o_ref.shape)

    o_ref[...] += jnp.dot(x_ref[...], w_ref[...],
                          preferred_element_type=jnp.float32)


def _matmul_bias_kernel_acc(x_ref, w_ref, b_ref, o_ref, acc_ref):
    # Low-precision output: keep an f32 VMEM accumulator.
    k = pl.program_id(2)

    @pl.when(k == 0)
    def _():
        acc_ref[...] = jnp.zeros_like(acc_ref)

    acc_ref[...] += jnp.dot(x_ref[...], w_ref[...],
                            preferred_element_type=jnp.float32)

    @pl.when(k == pl.num_programs(2) - 1)
    def _():
        o_ref[...] = (acc_ref[...] + b_ref[...]).astype(o_ref.dtype)


def _lr_forward_tiled(x, weight, bias, *, tm=512, tn=512, tk=512):
    batch, in_f = x.shape
    out_f = weight.shape[0]
    dt = x.dtype
    sub = _sublane(dt)

    # Minimal (tile-granule) padded problem sizes.
    m_min = _round_up(batch, sub)
    n_min = _round_up(out_f, _LANE)
    k_min = _round_up(in_f, _LANE)

    # Clamp tiles to the problem, keeping (sublane, 128) alignment.
    tm = min(tm, m_min)
    tn = min(tn, n_min)
    tk = min(tk, k_min)

    # v7x megacore: make sure the parallel (i, j) extent is >= 2 when possible
    # so both TensorCores get work (no-op on single-TC v5e/v6e).
    if math.ceil(m_min / tm) * math.ceil(n_min / tn) <= 1 and m_min >= 2 * sub:
        tm = _round_up((m_min + 1) // 2, sub)

    M = _round_up(batch, tm)
    N = _round_up(out_f, tn)
    K = _round_up(in_f, tk)

    # Pad only when actually needed (avoid an extra HBM pass over x).
    if (M, K) != (batch, in_f):
        x_p = jnp.pad(x, ((0, M - batch), (0, K - in_f)))
    else:
        x_p = x

    w_t = weight.T                                   # one-time (K, N) layout
    if (K, N) != (in_f, out_f):
        w_p = jnp.pad(w_t, ((0, K - in_f), (0, N - out_f)))
    else:
        w_p = w_t

    b2 = bias.reshape(1, out_f)
    b_p = jnp.pad(b2, ((0, 0), (0, N - out_f))) if N != out_f else b2

    # VMEM budget: double-buffered x/w/out tiles (+ f32 acc when used).
    itemsize = jnp.dtype(dt).itemsize
    est_bytes = (2 * tm * tk + 2 * tk * tn + 2 * tm * tn) * itemsize + tm * tn * 4
    vmem_limit = int(min(max(2 * est_bytes, 32 * 1024 * 1024), 64 * 1024 * 1024))

    if dt == jnp.float32:
        kernel = _matmul_bias_kernel_f32out
        scratch = ()
    else:
        kernel = _matmul_bias_kernel_acc
        scratch = (pltpu.VMEM((tm, tn), jnp.float32),)

    out = pl.pallas_call(
        kernel,
        out_shape=jax.ShapeDtypeStruct((M, N), dt),
        grid_spec=pltpu.PrefetchScalarGridSpec(
            num_scalar_prefetch=0,
            grid=(M // tm, N // tn, K // tk),
            in_specs=[
                pl.BlockSpec((tm, tk), lambda i, j, k: (i, k)),
                pl.BlockSpec((tk, tn), lambda i, j, k: (k, j)),
                pl.BlockSpec((1, tn), lambda i, j, k: (0, j)),
            ],
            out_specs=pl.BlockSpec((tm, tn), lambda i, j, k: (i, j)),
            scratch_shapes=scratch,
        ),
        compiler_params=pltpu.CompilerParams(
            # M/N shard across the 2 TensorCores on v7x; K is the reduction.
            dimension_semantics=("parallel", "parallel", "arbitrary"),
            vmem_limit_bytes=vmem_limit,
        ),
    )(x_p, w_p, b_p)
    return out[:batch, :out_f]


@jax.jit
def lr_forward(x, weight, bias):
    """Forward of LR: pred = x @ weight.T + bias (nn.Linear semantics)."""
    _, in_f = x.shape
    out_f = weight.shape[0]
    if in_f == 1 and out_f == 1:
        return _lr_forward_scalar(x, weight, bias)
    # TODO(synk): a dedicated VPU reduce path for out_features == 1 with
    # in_features > 1 would avoid 128x N-padding waste on the MXU path.
    return _lr_forward_tiled(x, weight, bias)


if __name__ == "__main__":
    input_size, output_size, batch = 1, 1, 100

    key = jax.random.PRNGKey(0)
    kx, kw, kb = jax.random.split(key, 3)

    # Matches the script:  x = torch.randn(100, 1) * 10
    x = jax.random.normal(kx, (batch, input_size), dtype=jnp.float32) * 10.0

    # Deterministic nn.Linear-style init: U(-1/sqrt(in), 1/sqrt(in))
    bound = 1.0 / float(input_size) ** 0.5
    weight = jax.random.uniform(
        kw, (output_size, input_size), minval=-bound, maxval=bound,
        dtype=jnp.float32)
    bias = jax.random.uniform(
        kb, (output_size,), minval=-bound, maxval=bound, dtype=jnp.float32)

    # Toy path (VPU, lane+sublane-dense blocks, SMEM scalars).
    pred = lr_forward(x, weight, bias)
    jax.block_until_ready(pred)
    ref = x @ weight.T + bias
    assert pred.shape == (batch, output_size)
    assert jnp.allclose(pred, ref, atol=1e-5, rtol=1e-5)

    # Also exercise the general tiled MXU path with larger (in, out); this
    # shape additionally triggers the tm-halving so the parallel grid >= 2.
    kx2, kw2, kb2 = jax.random.split(jax.random.PRNGKey(1), 3)
    x2 = jax.random.normal(kx2, (64, 32), dtype=jnp.float32)
    w2 = jax.random.normal(kw2, (16, 32), dtype=jnp.float32) * 0.1
    b2 = jax.random.normal(kb2, (16,), dtype=jnp.float32)
    pred2 = lr_forward(x2, w2, b2)
    jax.block_until_ready(pred2)
    ref2 = x2 @ w2.T + b2
    assert pred2.shape == (64, 16)
    assert jnp.allclose(pred2, ref2, atol=1e-4, rtol=1e-4)

    print("KERNEL_OK")
</pallas_src>

<mosaic_0001>
module attributes {stable_mosaic.version = 11 : i64} {
  func.func @_scalar_linear_kernel(%arg0: i32, %arg1: memref<8x128xf32, #tpu.memory_space<vmem>>, %arg2: memref<1x1xf32, #tpu.memory_space<smem>>, %arg3: memref<1x1xf32, #tpu.memory_space<smem>>, %arg4: memref<8x128xf32, #tpu.memory_space<vmem>>) attributes {dimension_semantics = [#tpu.dimension_semantics<parallel>], iteration_bounds = array<i64: 1>, scalar_prefetch = 0 : i64, scratch_operands = 0 : i64, tpu.core_type = #tpu.core_type<tc>, window_params = [{transform_indices = @transform_0, window_bounds = array<i64: 8, 128>}, {transform_indices = @transform_1, window_bounds = array<i64: 1, 1>}, {transform_indices = @transform_2, window_bounds = array<i64: 1, 1>}, {transform_indices = @transform_3, window_bounds = array<i64: 8, 128>}]} {
    %c0 = arith.constant 0 : index
    %c0_0 = arith.constant 0 : index
    %0 = vector.load %arg1[%c0, %c0_0] : memref<8x128xf32, #tpu.memory_space<vmem>>, vector<8x128xf32>
    %c0_1 = arith.constant 0 : index
    %c0_2 = arith.constant 0 : index
    %1 = memref.load %arg2[%c0_1, %c0_2] : memref<1x1xf32, #tpu.memory_space<smem>>
    %2 = vector.broadcast %1 : f32 to vector<8x128xf32>
    %3 = arith.mulf %0, %2 : vector<8x128xf32>
    %c0_3 = arith.constant 0 : index
    %c0_4 = arith.constant 0 : index
    %4 = memref.load %arg3[%c0_3, %c0_4] : memref<1x1xf32, #tpu.memory_space<smem>>
    %5 = vector.broadcast %4 : f32 to vector<8x128xf32>
    %6 = arith.addf %3, %5 : vector<8x128xf32>
    %c0_5 = arith.constant 0 : index
    %c0_6 = arith.constant 0 : index
    %7 = vector.load %arg4[%c0_5, %c0_6] : memref<8x128xf32, #tpu.memory_space<vmem>>, vector<8x128xf32>
    tpu.vector_store %arg4[%c0_5, %c0_6], %6 {strides = array<i32>} : memref<8x128xf32, #tpu.memory_space<vmem>>, vector<8x128xf32>,
    return
  }
  func.func @transform_0(%arg0: i32) -> (i32, i32) {
    %c0_i32 = arith.constant 0 : i32
    %c0_i32_0 = arith.constant 0 : i32
    return %arg0, %c0_i32 : i32, i32
  }
  func.func @transform_1(%arg0: i32) -> (i32, i32) {
    %c0_i32 = arith.constant 0 : i32
    %c0_i32_0 = arith.constant 0 : i32
    %c0_i32_1 = arith.constant 0 : i32
    return %c0_i32, %c0_i32_0 : i32, i32
  }
  func.func @transform_2(%arg0: i32) -> (i32, i32) {
    %c0_i32 = arith.constant 0 : i32
    %c0_i32_0 = arith.constant 0 : i32
    %c0_i32_1 = arith.constant 0 : i32
    return %c0_i32, %c0_i32_0 : i32, i32
  }
  func.func @transform_3(%arg0: i32) -> (i32, i32) {
    %c0_i32 = arith.constant 0 : i32
    %c0_i32_0 = arith.constant 0 : i32
    return %arg0, %c0_i32 : i32, i32
  }
}

</mosaic_0001>

<llo_original>
// kernel: lr_forward.1
$region0: #{lr_forward.1}
  #allocation0 [shape = 'u32[]', space=smem, size = 0x4, offset = 0x4, fixed_abs, tag = 'smem constant byte address 0x4 - core index']
  #allocation1 [shape = 'u32[144,128]{1,0:T(1,128)}', space=vmem, size = 0x12000, scoped, tag = 'internal scratch']
  #allocation2 [shape = 'f32[1,1]{1,0:T(1,128)S(6)}', space=smem, size = 0x200, scoped, tag = 'scoped memory for lr_forward.1']
  #allocation3 [shape = 'f32[1,1]{1,0:T(1,128)S(6)}', space=smem, size = 0x200, scoped, tag = 'scoped memory for lr_forward.1']
  %s0 = inlined_call_operand.vmem [shape: f32[8,128], index: 0, kind: input, shape index: {}]
  %s1 = inlined_call_operand.<no memory space> [shape: f32[1,1], index: 1, kind: input, shape index: {}]
  %s2 = inlined_call_operand.<no memory space> [shape: f32[1,1], index: 2, kind: input, shape index: {}]
  %s3 = inlined_call_operand.vmem [shape: f32[8,128], index: 3, kind: output, shape index: {}]
  %s4 = sld [smem:[#allocation0]]
  $region22: #{lr_forward.1} parent=0
    _
  %s6 = ssub.s32 1, %s4
  %s7 = scalar_select 0, %s6, %s4
  %8 = sst [smem:[#allocation2]] %s1
  %9 = sst [smem:[#allocation3]] %s2
  // Predicated region
  $region2: #{lr_forward.1} parent=0 // pred_check
    _
  $region3: #{lr_forward.1} parent=0 // pred_check_branch
    %11 = sbr.rel (0) target = $region5
  $region4: #{lr_forward.1} parent=0 // pred_region
    _
  $region5: #{lr_forward.1} parent=0 // pred_fallthru
    _
  // Predicated region
  $region6: #{lr_forward.1} parent=0 // pred_check
    _
  $region7: #{lr_forward.1} parent=0 // pred_check_branch
    %13 = sbr.rel (0) target = $region9
  $region8: #{lr_forward.1} parent=0 // pred_region
    _
  $region9: #{lr_forward.1} parent=0 // pred_fallthru
    _
  // Predicated region
  $region10: #{lr_forward.1} parent=0 // pred_check
    _
  $region11: #{lr_forward.1} parent=0 // pred_check_branch
    %15 = sbr.rel (0) target = $region13
  $region12: #{lr_forward.1} parent=0 // pred_region
    _
  $region13: #{lr_forward.1} parent=0 // pred_fallthru
    _
  %v16 = vld [vmem:[%s0] sm:$0xff]
  %s17 = sld [smem:[#allocation2]]
  %v18 = vstv %s17
  %v19 = vmul.f32 %v16, %v18
  %s20 = sld [smem:[#allocation3]]
  %v21 = vstv %s20
  %v22 = vadd.f32 %v19, %v21
  %23 = vst [vmem:[%s3] sm:$0xff] %v22
  // Predicated region
  $region14: #{lr_forward.1} parent=0 // pred_check
    _
  $region15: #{lr_forward.1} parent=0 // pred_check_branch
    %25 = sbr.rel (0) target = $region17
  $region16: #{lr_forward.1} parent=0 // pred_region
    _
  $region17: #{lr_forward.1} parent=0 // pred_fallthru
    _
  // Predicated region
  $region18: #{lr_forward.1} parent=0 // pred_check
    _
  $region19: #{lr_forward.1} parent=0 // pred_check_branch
    %27 = sbr.rel (0) target = $region21
  $region20: #{lr_forward.1} parent=0 // pred_region
    _
  $region21: #{lr_forward.1} parent=0 // pred_fallthru
    _

</llo_original>
